<compile_context>
chip_gen: v7x
topology: tpu7x:2x2x1
jax: 0.10.0
libtpu: 0.0.40
codegen_flags: <defaults>
</compile_context>

<pallas_src>
import jax
import jax.numpy as jnp
from jax.experimental import pallas as pl
from jax.experimental.pallas import tpu as pltpu


def _mass_maps_kernel(x_ref, o_ref):
    # x_ref: (bn, HW) float32 VMEM tile (bn images, flattened spatial dims)
    # o_ref: (bn, 3*HW) VMEM tile; plane k lives at lanes [k*HW, (k+1)*HW)
    x = x_ref[...]
    hw = x.shape[-1]

    # Two-pass unbiased variance (matches torch.std default, ddof=1).
    mean = jnp.sum(x, axis=-1, keepdims=True) * (1.0 / hw)
    xc = x - mean
    var = jnp.sum(xc * xc, axis=-1, keepdims=True) * (1.0 / (hw - 1))
    thresh = 3.0 * jnp.sqrt(var)                       # (bn, 1), >= 0

    m0 = x < 0.0
    m1 = x > thresh
    m2 = jnp.logical_not(jnp.logical_or(m0, m1))

    dt = o_ref.dtype
    # Three full-width lane-slice stores (lane-dense; unmasked when HW % 128 == 0).
    o_ref[:, 0:hw] = m0.astype(dt)
    o_ref[:, hw:2 * hw] = m1.astype(dt)
    o_ref[:, 2 * hw:3 * hw] = m2.astype(dt)


def _round_up(x: int, m: int) -> int:
    return ((x + m - 1) // m) * m


def _vmem_capacity_bytes() -> int:
    try:
        info = pltpu.get_tpu_info()
        cap = getattr(info, "vmem_capacity_bytes", None)
        if cap:
            return int(cap)
    except Exception:
        pass
    return 64 * 1024 * 1024   # conservative (v7x per-core)


def mass_maps_oracle(images: jax.Array, *, block_batch: int | None = None,
                     out_dtype=jnp.float32) -> jax.Array:
    """images: (N, 1, H, W) -> masks: (N, 3, H, W) of out_dtype (default f32)."""
    N, C, H, W = images.shape
    assert C == 1, "MassMapsOracle expects a single input channel"
    HW = H * W
    assert HW > 1, "std over a single pixel is undefined (would be NaN in torch)"

    out_itemsize = jnp.dtype(out_dtype).itemsize
    x = images.reshape(N, HW).astype(jnp.float32)

    # ---- per-generation VMEM budget for the double-buffered working set ----
    vmem_cap = _vmem_capacity_bytes()
    if vmem_cap >= 100 * 1024 * 1024:          # v5e / v6e: 128 MiB physical
        ws_budget = 96 * 1024 * 1024
    else:                                      # v7x: 64 MiB per core
        ws_budget = 26 * 1024 * 1024

    def tile_bytes(bn: int) -> int:
        # Real tiled VMEM footprint: sublanes round to 8, lanes to 128,
        # x2 for double buffering, input + output blocks.
        sub = _round_up(bn, 8)
        in_b = sub * _round_up(HW, 128) * 4
        out_b = sub * _round_up(3 * HW, 128) * out_itemsize
        return 2 * (in_b + out_b)

    # ---- choose images-per-grid-step (bn) ---------------------------------
    target_bn = max(1, (512 * 1024) // HW)     # ~2 MiB of f32 input per step
    if block_batch is not None:
        bn = max(1, min(int(block_batch), N))
    else:
        divisors = sorted({d for i in range(1, int(N ** 0.5) + 1) if N % i == 0
                           for d in (i, N // i)})
        fits = [d for d in divisors if tile_bytes(d) <= ws_budget] or [1]
        # Keep >= 2 grid steps when N >= 2 so both v7x TensorCores get work.
        multi = [d for d in fits if N // d >= 2] or fits
        below = [d for d in multi if d <= target_bn]
        bn = max(below) if below else min(multi)
    # Clamp any bn (incl. user-supplied) toward the VMEM budget.
    while bn > 1 and tile_bytes(bn) > ws_budget:
        bn = max(1, bn // 2)

    # ---- batch grouping (pad only if an explicit bn does not divide N) ----
    G = -(-N // bn)
    Np = G * bn
    padded = Np != N
    if padded:
        x = jnp.pad(x, ((0, Np - N), (0, 0)))
    x = x.reshape(G, bn, HW)

    working_set = tile_bytes(bn)
    vmem_limit = min(vmem_cap, max(32 * 1024 * 1024, working_set + 8 * 1024 * 1024))

    out = pl.pallas_call(
        _mass_maps_kernel,
        out_shape=jax.ShapeDtypeStruct((G, bn, 3 * HW), out_dtype),
        grid_spec=pltpu.PrefetchScalarGridSpec(
            num_scalar_prefetch=0,
            grid=(G,),
            in_specs=[
                # Leading group dim squeezed: kernel sees a dense (bn, HW) face.
                pl.BlockSpec((pl.Squeezed(), bn, HW), lambda g: (g, 0, 0)),
            ],
            # NOTE: pipeline_mode=pl.Buffered(3) is an optional sweep if a trace
            # shows exposed DMA at step boundaries (needs VMEM headroom on v7x).
            out_specs=pl.BlockSpec((pl.Squeezed(), bn, 3 * HW), lambda g: (g, 0, 0)),
        ),
        compiler_params=pltpu.CompilerParams(
            dimension_semantics=("parallel",),
            vmem_limit_bytes=int(vmem_limit),
        ),
        cost_estimate=pl.CostEstimate(
            flops=8 * Np * HW,                                  # sums + centering + compares
            transcendentals=Np,                                 # one sqrt per image
            bytes_accessed=Np * HW * (4 + 3 * out_itemsize),    # in + 3 mask planes
        ),
    )(x)

    out = out.reshape(Np, 3, H, W)
    if padded:
        out = out[:N]
    return out


def _reference(images: jax.Array) -> jax.Array:
    """Pure-JAX reference mirroring the PyTorch forward (for verification)."""
    N, C, H, W = images.shape
    flat = images.reshape(N, C, H * W)
    stds = jnp.std(flat, axis=-1, ddof=1)                       # (N, C)
    x = images[:, 0]                                            # (N, H, W)
    m0 = x < 0.0
    m1 = x > 3.0 * stds[:, 0, None, None]
    m2 = jnp.logical_not(jnp.logical_or(m1, m0))
    return jnp.stack([m0, m1, m2], axis=1).astype(jnp.float32)


if __name__ == "__main__":
    key = jax.random.PRNGKey(0)

    # Small shape consistent with the module: (N, C=1, H, W).
    N, C, H, W = 2, 1, 16, 16
    images = jax.random.normal(key, (N, C, H, W), dtype=jnp.float32)

    out = jax.block_until_ready(mass_maps_oracle(images))
    ref = _reference(images)
    assert out.shape == (N, 3, H, W)
    assert out.dtype == jnp.float32
    assert jnp.allclose(out, ref), "Pallas output mismatch vs reference (small)"

    # Divisor-based bn (no padding), multi-step grid: N=10 -> bn=5, G=2.
    key2 = jax.random.PRNGKey(1)
    images2 = jax.random.normal(key2, (10, 1, 16, 16), dtype=jnp.float32) * 2.0 + 0.5
    out2 = jax.block_until_ready(mass_maps_oracle(images2))
    assert out2.shape == (10, 3, 16, 16)
    assert jnp.allclose(out2, _reference(images2)), "mismatch (divisor path)"

    # Prime batch: bn=1, G=7.
    key3 = jax.random.PRNGKey(2)
    images3 = jax.random.normal(key3, (7, 1, 16, 16), dtype=jnp.float32)
    out3 = jax.block_until_ready(mass_maps_oracle(images3))
    assert jnp.allclose(out3, _reference(images3)), "mismatch (prime batch)"

    # Explicit non-dividing block_batch exercises the pad + slice fallback.
    out4 = jax.block_until_ready(mass_maps_oracle(images2, block_batch=4))
    assert out4.shape == (10, 3, 16, 16)
    assert jnp.allclose(out4, _reference(images2)), "mismatch (padded fallback)"

    print("KERNEL_OK")
</pallas_src>

<mosaic_0001>
module attributes {stable_mosaic.version = 11 : i64} {
  func.func @_mass_maps_kernel(%arg0: i32, %arg1: memref<1x1x256xf32, #tpu.memory_space<vmem>>, %arg2: memref<1x1x768xf32, #tpu.memory_space<vmem>>) attributes {dimension_semantics = [#tpu.dimension_semantics<parallel>], iteration_bounds = array<i64: 2>, scalar_prefetch = 0 : i64, scratch_operands = 0 : i64, tpu.core_type = #tpu.core_type<tc>, window_params = [{transform_indices = @transform_0, window_bounds = array<i64: 1, 1, 256>}, {transform_indices = @transform_1, window_bounds = array<i64: 1, 1, 768>}]} {
    %c0 = arith.constant 0 : index
    %c0_0 = arith.constant 0 : index
    %c0_1 = arith.constant 0 : index
    %0 = vector.load %arg1[%c0, %c0_0, %c0_1] : memref<1x1x256xf32, #tpu.memory_space<vmem>>, vector<1x1x256xf32>
    %1 = vector.shape_cast %0 : vector<1x1x256xf32> to vector<1x256xf32>
    %cst = arith.constant dense<0.000000e+00> : vector<1xf32>
    %2 = vector.multi_reduction <add>, %1, %cst [1] : vector<1x256xf32> to vector<1xf32>
    %3 = vector.shape_cast %2 : vector<1xf32> to vector<1x1xf32>
    %cst_2 = arith.constant 3.906250e-03 : f32
    %4 = vector.broadcast %cst_2 : f32 to vector<1x1xf32>
    %5 = arith.mulf %3, %4 : vector<1x1xf32>
    %6 = vector.broadcast %5 : vector<1x1xf32> to vector<1x256xf32>
    %7 = arith.subf %1, %6 : vector<1x256xf32>
    %8 = arith.mulf %7, %7 : vector<1x256xf32>
    %cst_3 = arith.constant dense<0.000000e+00> : vector<1xf32>
    %9 = vector.multi_reduction <add>, %8, %cst_3 [1] : vector<1x256xf32> to vector<1xf32>
    %10 = vector.shape_cast %9 : vector<1xf32> to vector<1x1xf32>
    %cst_4 = arith.constant 0.00392156886 : f32
    %11 = vector.broadcast %cst_4 : f32 to vector<1x1xf32>
    %12 = arith.mulf %10, %11 : vector<1x1xf32>
    %13 = math.sqrt %12 : vector<1x1xf32>
    %cst_5 = arith.constant 3.000000e+00 : f32
    %14 = vector.broadcast %cst_5 : f32 to vector<1x1xf32>
    %15 = arith.mulf %14, %13 : vector<1x1xf32>
    %cst_6 = arith.constant 0.000000e+00 : f32
    %16 = vector.broadcast %cst_6 : f32 to vector<1x256xf32>
    %17 = arith.cmpf olt, %1, %16 : vector<1x256xf32>
    %18 = vector.broadcast %15 : vector<1x1xf32> to vector<1x256xf32>
    %19 = arith.cmpf ogt, %1, %18 : vector<1x256xf32>
    %20 = arith.ori %17, %19 : vector<1x256xi1>
    %cst_7 = arith.constant dense<true> : vector<1x256xi1>
    %21 = arith.xori %20, %cst_7 : vector<1x256xi1>
    %22 = arith.extui %17 : vector<1x256xi1> to vector<1x256xi32>
    %23 = arith.sitofp %22 : vector<1x256xi32> to vector<1x256xf32>
    %c0_8 = arith.constant 0 : index
    %c0_9 = arith.constant 0 : index
    %c0_10 = arith.constant 0 : index
    %24 = vector.load %arg2[%c0_8, %c0_9, %c0_10] : memref<1x1x768xf32, #tpu.memory_space<vmem>>, vector<1x1x256xf32>
    %25 = vector.shape_cast %24 : vector<1x1x256xf32> to vector<1x256xf32>
    %26 = vector.shape_cast %23 : vector<1x256xf32> to vector<1x1x256xf32>
    tpu.vector_store %arg2[%c0_8, %c0_9, %c0_10], %26 {strides = array<i32>} : memref<1x1x768xf32, #tpu.memory_space<vmem>>, vector<1x1x256xf32>,
    %27 = arith.extui %19 : vector<1x256xi1> to vector<1x256xi32>
    %28 = arith.sitofp %27 : vector<1x256xi32> to vector<1x256xf32>
    %c0_11 = arith.constant 0 : index
    %c0_12 = arith.constant 0 : index
    %c256 = arith.constant 256 : index
    %29 = vector.load %arg2[%c0_11, %c0_12, %c256] : memref<1x1x768xf32, #tpu.memory_space<vmem>>, vector<1x1x256xf32>
    %30 = vector.shape_cast %29 : vector<1x1x256xf32> to vector<1x256xf32>
    %31 = vector.shape_cast %28 : vector<1x256xf32> to vector<1x1x256xf32>
    tpu.vector_store %arg2[%c0_11, %c0_12, %c256], %31 {strides = array<i32>} : memref<1x1x768xf32, #tpu.memory_space<vmem>>, vector<1x1x256xf32>,
    %32 = arith.extui %21 : vector<1x256xi1> to vector<1x256xi32>
    %33 = arith.sitofp %32 : vector<1x256xi32> to vector<1x256xf32>
    %c0_13 = arith.constant 0 : index
    %c0_14 = arith.constant 0 : index
    %c512 = arith.constant 512 : index
    %34 = vector.load %arg2[%c0_13, %c0_14, %c512] : memref<1x1x768xf32, #tpu.memory_space<vmem>>, vector<1x1x256xf32>
    %35 = vector.shape_cast %34 : vector<1x1x256xf32> to vector<1x256xf32>
    %36 = vector.shape_cast %33 : vector<1x256xf32> to vector<1x1x256xf32>
    tpu.vector_store %arg2[%c0_13, %c0_14, %c512], %36 {strides = array<i32>} : memref<1x1x768xf32, #tpu.memory_space<vmem>>, vector<1x1x256xf32>,
    return
  }
  func.func @transform_0(%arg0: i32) -> (i32, i32, i32) {
    %c0_i32 = arith.constant 0 : i32
    %c0_i32_0 = arith.constant 0 : i32
    %c0_i32_1 = arith.constant 0 : i32
    return %arg0, %c0_i32, %c0_i32_0 : i32, i32, i32
  }
  func.func @transform_1(%arg0: i32) -> (i32, i32, i32) {
    %c0_i32 = arith.constant 0 : i32
    %c0_i32_0 = arith.constant 0 : i32
    %c0_i32_1 = arith.constant 0 : i32
    return %arg0, %c0_i32, %c0_i32_0 : i32, i32, i32
  }
}

</mosaic_0001>

<llo_original>
// kernel: tpu_custom_call.1
$region0: #{tpu_custom_call.1}
  #allocation0 [shape = 'u32[]', space=smem, size = 0x4, offset = 0x4, fixed_abs, tag = 'smem constant byte address 0x4 - core index']
  #allocation1 [shape = 'u32[144,128]{1,0:T(1,128)}', space=vmem, size = 0x12000, scoped, tag = 'internal scratch']
  %s0 = inlined_call_operand.hbm [shape: f32[2,1,256], index: 0, kind: input, shape index: {}]
  %s1 = inlined_call_operand.hbm [shape: f32[2,1,768], index: 1, kind: output, shape index: {}]
  %s2 = sld [smem:[#allocation0]]
  $region41: #{tpu_custom_call.1} parent=0
    _
  %s4 = ssub.s32 1, %s2
  %s5 = scalar_select 0, %s4, %s2
  $region1: #{tpu_custom_call.1} parent=0
    #allocation2 [shape = 'u8[2048]{0}', space=vmem, size = 0x800, scoped, tag = 'input window, operand 0']
    #allocation3 [shape = 's32[2]{0}', space=sflag, size = 0x8, scoped, tag = 'scoped memory for tpu_custom_call.1']
    #allocation4 [shape = 's32[2]{0}', space=sflag, size = 0x8, scoped, tag = 'scoped memory for tpu_custom_call.1']
    #allocation5 [shape = 'u8[6144]{0}', space=vmem, size = 0x1800, scoped, tag = 'output window, operand 0']
    %6 = vsyncpa [#allocation3], 0
    %s7 = scalar_lea.sflag [#allocation3], 1
    %8 = vsyncpa %s7, 0
    %9 = vsyncpa [#allocation4], 0
    %s10 = scalar_lea.sflag [#allocation4], 1
    %11 = vsyncpa %s10, 0
    loop: start=0, step=1, limit=4
    $region2: #{tpu_custom_call.1} parent=1 // loop_pre_header
      _
    $region3: #{tpu_custom_call.1} parent=1 // loop_header
      %s13 = sphi 0, %s17
      %p14 = scmp.ge.s32.totalorder %s13, 4
      %s23 = sphi 0, %s25
      %s26 = sphi 0, %s23
      %s27 = sphi 0, %s26
      %s43 = sphi 0, %s27
      %s49 = sphi 0, %s51
      %s52 = sphi 0, %s49
      %s53 = sphi 0, %s52
      %s69 = sphi 0, %s53
    $region4: #{tpu_custom_call.1} parent=1 // loop_header_branch
      %16 = sbr.rel (%p14) target = $region8
    $region5: #{tpu_custom_call.1} parent=1 // loop_body
      %s18 = ssub.s32 %s13, 1
      %s19 = ssub.s32 %s13, 2
      %s20 = sadd.s32 %s13, 1
      %s21 = ssub.s32 %s13, %s20
      %p22 = scmp.eq.s32.totalorder %s21, 0
      %s24 = sadd.s32 %s23, 1
      %s25 = scalar_select %p22, %s23, %s24
      %p28 = pneg %p22
      %p29 = scmp.eq.s32.totalorder %s13, 1
      %p30 = por %p28, %p29
      %p31 = scmp.ne.s32.totalorder %s23, %s26
      %p32 = scmp.eq.s32.totalorder %s13, 0
      %p33 = por %p31, %p32
      %p34 = scmp.ne.s32.totalorder %s23, %s26
      %p35 = scmp.eq.s32.totalorder %s18, 1
      %p36 = por %p34, %p35
      %p37 = scmp.ne.s32.totalorder %s26, %s27
      %p38 = scmp.eq.s32.totalorder %s18, 0
      %p39 = por %p37, %p38
      %p40 = scmp.ne.s32.totalorder %s26, %s27
      %p41 = scmp.eq.s32.totalorder %s19, 1
      %p42 = por %p40, %p41
      %p44 = scmp.ne.s32.totalorder %s27, %s43
      %p45 = scmp.eq.s32.totalorder %s19, 0
      %p46 = por %p44, %p45
      %s47 = ssub.s32 %s13, %s20
      %p48 = scmp.eq.s32.totalorder %s47, 0
      %s50 = sadd.s32 %s49, 1
      %s51 = scalar_select %p48, %s49, %s50
      %p54 = pneg %p48
      %p55 = scmp.eq.s32.totalorder %s13, 1
      %p56 = por %p54, %p55
      %p57 = scmp.ne.s32.totalorder %s49, %s52
      %p58 = scmp.eq.s32.totalorder %s13, 0
      %p59 = por %p57, %p58
      %p60 = scmp.ne.s32.totalorder %s49, %s52
      %p61 = scmp.eq.s32.totalorder %s18, 1
      %p62 = por %p60, %p61
      %p63 = scmp.ne.s32.totalorder %s52, %s53
      %p64 = scmp.eq.s32.totalorder %s18, 0
      %p65 = por %p63, %p64
      %p66 = scmp.ne.s32.totalorder %s52, %s53
      %p67 = scmp.eq.s32.totalorder %s19, 1
      %p68 = por %p66, %p67
      %p70 = scmp.ne.s32.totalorder %s53, %s69
      %p71 = scmp.eq.s32.totalorder %s19, 0
      %p72 = por %p70, %p71
      %p73 = scmp.le.s32.totalorder 1, %s13
      %p74 = scmp.lt.s32.totalorder %s13, 3
      %p75 = pnand %p73, %p74
      %p76 = pneg %p75
      // Predicated region
      $region9: #{tpu_custom_call.1} parent=5 // pred_check
        _
      $region10: #{tpu_custom_call.1} parent=5 // pred_check_branch
        %78 = sbr.rel (%p75) target = $region12
      $region11: #{tpu_custom_call.1} parent=5 // pred_region
        %s79 = ssub.s32 %s13, 1
      $region12: #{tpu_custom_call.1} parent=5 // pred_fallthru
        _
      %p80 = scmp.lt.s32.totalorder %s13, 2
      // Predicated region
      $region13: #{tpu_custom_call.1} parent=5 // pred_check
        %p81 = pneg %p80
      $region14: #{tpu_custom_call.1} parent=5 // pred_check_branch
        %83 = sbr.rel (%p81) target = $region16
      $region15: #{tpu_custom_call.1} parent=5 // pred_region
        // Predicated region
        $region17: #{tpu_custom_call.1} parent=15 // pred_check
          %p84 = pneg %p33
        $region18: #{tpu_custom_call.1} parent=15 // pred_check_branch
          %86 = sbr.rel (%p84) target = $region20
        $region19: #{tpu_custom_call.1} parent=15 // pred_region
          %s87 = sand.u32 %s23, 1
          %s88 = scalar_lea.sflag [#allocation3], %s87
          %s89 = sand.u32 %s23, 1
          %s90 = smul.addr %s89, 2
          %s91 = scalar_lea.vmem [#allocation2], %s90
          %s93 = ssub.s32 32, 32
          %94 = vsyncadd %s88, %s93
          %s95 = smul.addr %s13, 2
          %s96 = smul.addr %s95, 16
          %s97 = scalar_lea.hbm %s0, %s96
          %s99 = sshll.u32 %s91, 4
          %s100 = int_to_ptr.vmem [resolvable:$true] %s99
          %102 = dma.hbm_to_vmem [thread:$0]  %s97, 32, %s100, %s88
        $region20: #{tpu_custom_call.1} parent=15 // pred_fallthru
          _
      $region16: #{tpu_custom_call.1} parent=5 // pred_fallthru
        _
      %p103 = scmp.le.s32.totalorder 1, %s13
      %p104 = scmp.lt.s32.totalorder %s13, 3
      %p105 = pnand %p103, %p104
      %p106 = pneg %p105
      // Predicated region
      $region21: #{tpu_custom_call.1} parent=5 // pred_check
        _
      $region22: #{tpu_custom_call.1} parent=5 // pred_check_branch
        %108 = sbr.rel (%p105) target = $region24
      $region23: #{tpu_custom_call.1} parent=5 // pred_region
        %s109 = ssub.s32 %s13, 1
        %s110 = sand.u32 %s26, 1
        %s111 = scalar_lea.sflag [#allocation3], %s110
        %s112 = sand.u32 %s26, 1
        %s113 = smul.addr %s112, 2
        %s114 = scalar_lea.vmem [#allocation2], %s113
        // Predicated region
        $region25: #{tpu_custom_call.1} parent=23 // pred_check
          %p115 = pneg %p39
        $region26: #{tpu_custom_call.1} parent=23 // pred_check_branch
          %117 = sbr.rel (%p115) target = $region28
        $region27: #{tpu_custom_call.1} parent=23 // pred_region
          %118 = dma.done %s111, 32
        $region28: #{tpu_custom_call.1} parent=23 // pred_fallthru
          _
        %s119 = sand.u32 %s26, 1
        %s120 = scalar_lea.sflag [#allocation3], %s119
        %s121 = sand.u32 %s26, 1
        %s122 = smul.addr %s121, 2
        %s123 = scalar_lea.vmem [#allocation2], %s122
        %p124 = pneg %p39
        %p125 = pneg %p36
        %p126 = pneg %p65
        %p127 = pneg %p62
        %s128 = sand.u32 %s52, 1
        %s129 = scalar_lea.sflag [#allocation4], %s128
        %s130 = sand.u32 %s52, 1
        %s131 = smul.addr %s130, 6
        %s132 = scalar_lea.vmem [#allocation5], %s131
        %v133 = vld [vmem:[%s114] sm:$0x3]
        %v135 = vlaneseq
        %v136 = vshrl.u32 %v135, 7
        %v137 = vsub.s32 0, %v136
        %v138 = vrot.slane %v133, %v137
        %v139 = vlaneseq
        %v140 = vshrl.u32 %v139, 7
        %v141 = vsub.s32 1, %v140
        %v142 = vrot.slane %v133, %v141
        %vm145 = vcmask 1040384
        %v146 = vsel %vm145, %v138, 0.0
        %v147 = vsel %vm145, %v142, 0.0
        %v148 = vadd.f32 %v146, %v147
        %149 = vadd.xlane.f32.xlu0 %v148
        %v150 = vpop.xlane.xlu0 %149
        %v151 = vmul.f32 %v150, 0.00390625
        %v153 = vlaneseq
        %v154 = vshrl.u32 %v153, 7
        %v155 = vsub.s32 0, %v154
        %v156 = vrot.slane %v151, %v155
        %v158 = vsub.f32 %v133, %v156
        %v159 = vmul.f32 %v158, %v158
        %v161 = vlaneseq
        %v162 = vshrl.u32 %v161, 7
        %v163 = vsub.s32 0, %v162
        %v164 = vrot.slane %v159, %v163
        %v165 = vlaneseq
        %v166 = vshrl.u32 %v165, 7
        %v167 = vsub.s32 1, %v166
        %v168 = vrot.slane %v159, %v167
        %v171 = vsel %vm145, %v164, 0.0
        %v172 = vsel %vm145, %v168, 0.0
        %v173 = vadd.f32 %v171, %v172
        %174 = vadd.xlane.f32.xlu0 %v173
        %v175 = vpop.xlane.xlu0 %174
        %v176 = vmul.f32 %v175, 0.003921569
        %v177 = vrsqrt.pop %v176
        %v178 = vmul.f32 %v176, %v177
        %vm179 = vcmp.eq.f32.partialorder %v176, inf
        %v180 = vsel %vm179, %v176, %v178
        %vm181 = vcmp.eq.f32.partialorder %v176, 0.0
        %v182 = vand.u32 %v176, 2147483648
        %v183 = vsel %vm181, %v182, %v180
        %v184 = vmul.f32 %v183, 3.0
        %vm185 = vcmp.lt.f32.partialorder %v133, 0.0
        %v187 = vlaneseq
        %v188 = vshrl.u32 %v187, 7
        %v189 = vsub.s32 0, %v188
        %v190 = vrot.slane %v184, %v189
        %vm192 = vcmp.gt.f32.partialorder %v133, %v190
        %vm193 = vmor %vm185, %vm192
        %vm194 = vmxor %vm193, 1
        %v195 = vsel %vm185, 1, 0
        %v196 = vcvt.s32.f32 %v195
        %v197 = vlaneseq
        %vm198 = vcmp.ge.s32.totalorder %v197, 0
        %vm199 = vcmp.lt.s32.totalorder %v197, 256
        %vm200 = vmand %vm198, %vm199
        %201 = vst.msk [vmem:[%s132] sm:$0x3] %vm200, %v196
        %v202 = vsel %vm192, 1, 0
        %v203 = vcvt.s32.f32 %v202
        %204 = vst.msk [vmem:[%s132 + $0x2] sm:$0x3] %vm200, %v203
        %v205 = vsel %vm194, 1, 0
        %v206 = vcvt.s32.f32 %v205
        %207 = vst.msk [vmem:[%s132 + $0x4] sm:$0x3] %vm200, %v206
        %s208 = sand.u32 %s52, 1
        %s209 = scalar_lea.sflag [#allocation4], %s208
        %s210 = sand.u32 %s52, 1
        %s211 = smul.addr %s210, 6
        %s212 = scalar_lea.vmem [#allocation5], %s211
        // Predicated region
        $region29: #{tpu_custom_call.1} parent=23 // pred_check
          %p213 = pneg %p62
        $region30: #{tpu_custom_call.1} parent=23 // pred_check_branch
          %215 = sbr.rel (%p213) target = $region32
        $region31: #{tpu_custom_call.1} parent=23 // pred_region
          %s217 = ssub.s32 96, 96
          %218 = vsyncadd %s209, %s217
          %s219 = smul.addr %s18, 6
          %s220 = smul.addr %s219, 16
          %s221 = scalar_lea.hbm %s1, %s220
          %s223 = sshll.u32 %s212, 4
          %s224 = int_to_ptr.vmem [resolvable:$true] %s223
          %226 = dma.vmem_to_hbm [thread:$0]  %s224, 96, %s221, %s209
        $region32: #{tpu_custom_call.1} parent=23 // pred_fallthru
          _
      $region24: #{tpu_custom_call.1} parent=5 // pred_fallthru
        _
      %p227 = scmp.le.s32.totalorder 2, %s13
      // Predicated region
      $region33: #{tpu_custom_call.1} parent=5 // pred_check
        %p228 = pneg %p227
      $region34: #{tpu_custom_call.1} parent=5 // pred_check_branch
        %230 = sbr.rel (%p228) target = $region36
      $region35: #{tpu_custom_call.1} parent=5 // pred_region
        %s231 = ssub.s32 %s13, 2
        // Predicated region
        $region37: #{tpu_custom_call.1} parent=35 // pred_check
          %p232 = pneg %p68
        $region38: #{tpu_custom_call.1} parent=35 // pred_check_branch
          %234 = sbr.rel (%p232) target = $region40
        $region39: #{tpu_custom_call.1} parent=35 // pred_region
          %s235 = sand.u32 %s53, 1
          %s236 = scalar_lea.sflag [#allocation4], %s235
          %s237 = sand.u32 %s53, 1
          %s238 = smul.addr %s237, 6
          %s239 = scalar_lea.vmem [#allocation5], %s238
          %240 = dma.done %s236, 96
        $region40: #{tpu_custom_call.1} parent=35 // pred_fallthru
          _
      $region36: #{tpu_custom_call.1} parent=5 // pred_fallthru
        _
    $region6: #{tpu_custom_call.1} parent=1 // loop_footer
      %s17 = sadd.s32 1, %s13
    $region7: #{tpu_custom_call.1} parent=1 // loop_footer_branch
      %12 = sbr.rel target = $region3
    $region8: #{tpu_custom_call.1} parent=1 // loop_exit
      _
    %241 = vsyncpa [#allocation3], 1
    %s242 = scalar_lea.sflag [#allocation3], 1
    %243 = vsyncpa %s242, 1
    %244 = vsyncpa [#allocation4], 1
    %s245 = scalar_lea.sflag [#allocation4], 1
    %246 = vsyncpa %s245, 1

</llo_original>
